<compile_context>
chip_gen: v5e
topology: v5e:2x2
jax: 0.10.0
libtpu: 0.0.40
codegen_flags: <defaults>
</compile_context>

<pallas_src>
import jax
import jax.numpy as jnp
from jax.experimental import pallas as pl
from jax.experimental.pallas import tpu as pltpu

# Fixed (non-trainable) 3x3 kernel from the module __init__ (reference only;
# the Pallas kernel hard-codes the same weights as a separable 9*x - boxsum).
SOBEL_KERNEL = jnp.array(
    [[-1.0, -1.0, -1.0],
     [-1.0,  8.0, -1.0],
     [-1.0, -1.0, -1.0]], dtype=jnp.float32)


def _stencil(xm, top, bottom):
    """3x3 Laplacian on a row tile.

    xm:          (TH, W)  current row tile (channel-1 plane rows).
    top, bottom: (1, W)   rows immediately above / below the tile, already
                          zeroed if the tile touches the image boundary.
    Returns (TH, W):  8*x - sum(8 neighbors)  ==  9*x - boxsum3x3(x).
    """
    TH, W = xm.shape
    xe = jnp.concatenate([top, xm, bottom], axis=0)            # (TH+2, W)

    # Horizontal 3-tap sum with zero padding in W.
    # jnp.roll has well-defined semantics (result[j] = x[j-shift]) and lowers
    # to lane shifts; boundary columns are zeroed with masks.
    col = jax.lax.broadcasted_iota(jnp.int32, xe.shape, 1)
    lft = jnp.where(col == 0,     0.0, jnp.roll(xe,  1, axis=1))  # xe[:, j-1]
    rgt = jnp.where(col == W - 1, 0.0, jnp.roll(xe, -1, axis=1))  # xe[:, j+1]
    h = xe + lft + rgt                                          # (TH+2, W)

    # Vertical 3-tap sum via three sublane-shifted slices of the extended tile.
    box = h[0:TH, :] + h[1:TH + 1, :] + h[2:TH + 2, :]          # (TH, W)

    return 9.0 * xm - box


def _sobel_kernel_single(x_ref, o_ref):
    # x_ref: (1, 1, H, W) channel-1 plane of one image; o_ref: (1, 1, H, W).
    xm = x_ref[0, 0]                                            # (H, W)
    zero_row = jnp.zeros((1, xm.shape[1]), dtype=xm.dtype)
    o_ref[0, 0] = _stencil(xm, zero_row, zero_row)


def _sobel_kernel_tiled(x_ref, top_ref, bot_ref, o_ref):
    # x_ref:   (1, 1, TH, W) current row tile (channel 1).
    # top_ref: (1, 1, 8, W)  8-row block whose LAST row is the row just above
    #                        the tile (clamped / garbage when h == 0).
    # bot_ref: (1, 1, 8, W)  8-row block whose FIRST row is the row just below
    #                        the tile (clamped / garbage when h == last).
    # o_ref:   (1, 1, TH, W)
    h = pl.program_id(1)
    nh = pl.num_programs(1)

    xm = x_ref[0, 0]                                            # (TH, W)
    top_row = top_ref[0, 0][7:8, :]                             # (1, W)
    bot_row = bot_ref[0, 0][0:1, :]                             # (1, W)

    # Zero the halo rows at the image boundary (emulates conv2d padding=1).
    top_row = jnp.where(h == 0,      0.0, top_row)
    bot_row = jnp.where(h == nh - 1, 0.0, bot_row)

    o_ref[0, 0] = _stencil(xm, top_row, bot_row)


def _pick_tile_rows(H, W, target_tile_bytes):
    """Largest multiple-of-8 divisor of H whose f32 tile fits the byte budget."""
    max_rows = max(8, target_tile_bytes // (W * 4))
    if H <= max_rows:
        return H
    best = None
    th = 8
    while th <= max_rows:
        if H % th == 0:
            best = th
        th += 8
    # TODO(synk): ragged H (no suitable divisor) falls back to one full-plane
    # tile per image instead of partial row tiles.
    return best if best is not None else H


def sobel_conv(x, *, target_tile_bytes=2 * 1024 * 1024):
    """x: (N, C, H, W) float -> (N, 1, H, W) float32.  Requires C >= 2."""
    N, C, H, W = x.shape
    assert C >= 2, "Sobel_conv takes channel index 1, so C must be >= 2"
    x = x.astype(jnp.float32)

    TH = _pick_tile_rows(H, W, target_tile_bytes)
    HT = H // TH
    out_shape = jax.ShapeDtypeStruct((N, 1, H, W), jnp.float32)

    if HT == 1:
        # One row tile covers the whole image: no cross-tile halo needed.
        grid = (N,)
        in_specs = [pl.BlockSpec((1, 1, H, W), lambda n: (n, 1, 0, 0))]
        out_specs = pl.BlockSpec((1, 1, H, W), lambda n: (n, 0, 0, 0))
        kernel = _sobel_kernel_single
        dims = ("parallel",)
        args = (x,)
    else:
        # Row-tiled path: TH is a multiple of 8 and divides H, so H % 8 == 0.
        hb8 = TH // 8        # number of 8-row blocks per tile
        nb8 = H // 8         # total number of 8-row blocks
        grid = (N, HT)
        in_specs = [
            # Main TH-row tile of channel 1.
            pl.BlockSpec((1, 1, TH, W), lambda n, h: (n, 1, h, 0)),
            # 8-row block containing the row just above the tile (clamped at 0).
            pl.BlockSpec((1, 1, 8, W),
                         lambda n, h: (n, 1, jnp.maximum(h * hb8 - 1, 0), 0)),
            # 8-row block containing the row just below the tile (clamped).
            pl.BlockSpec((1, 1, 8, W),
                         lambda n, h: (n, 1,
                                       jnp.minimum((h + 1) * hb8, nb8 - 1), 0)),
        ]
        out_specs = pl.BlockSpec((1, 1, TH, W), lambda n, h: (n, 0, h, 0))
        kernel = _sobel_kernel_tiled
        dims = ("parallel", "parallel")
        args = (x, x, x)

    return pl.pallas_call(
        kernel,
        out_shape=out_shape,
        grid_spec=pltpu.PrefetchScalarGridSpec(
            num_scalar_prefetch=0,
            grid=grid,
            in_specs=in_specs,
            out_specs=out_specs,
        ),
        compiler_params=pltpu.CompilerParams(
            dimension_semantics=dims,
            vmem_limit_bytes=32 * 1024 * 1024,
        ),
    )(*args)


def _reference(x):
    """Pure-JAX reference using lax.conv_general_dilated (matches F.conv2d)."""
    x1 = x[:, 1][:, None, :, :].astype(jnp.float32)  # (N, 1, H, W)
    w = SOBEL_KERNEL[None, None, :, :]               # (O=1, I=1, 3, 3)
    return jax.lax.conv_general_dilated(
        x1, w, window_strides=(1, 1), padding=((1, 1), (1, 1)),
        dimension_numbers=("NCHW", "OIHW", "NCHW"))


if __name__ == "__main__":
    key = jax.random.PRNGKey(0)

    # Small shape consistent with the module (exercises the single-tile path).
    N, C, H, W = 2, 4, 16, 16
    x = jax.random.normal(key, (N, C, H, W), dtype=jnp.float32)
    y = sobel_conv(x)
    jax.block_until_ready(y)
    y_ref = _reference(x)
    assert y.shape == (N, 1, H, W)
    assert jnp.allclose(y, y_ref, atol=1e-4, rtol=1e-4)

    # Also exercise the H-tiled halo path by forcing a small row-tile budget
    # (TH = 16 -> 2 row tiles per image, lane-dense W = 128).
    N2, C2, H2, W2 = 2, 4, 32, 128
    x2 = jax.random.normal(jax.random.PRNGKey(0), (N2, C2, H2, W2),
                           dtype=jnp.float32)
    y2 = sobel_conv(x2, target_tile_bytes=16 * W2 * 4)
    jax.block_until_ready(y2)
    y2_ref = _reference(x2)
    assert y2.shape == (N2, 1, H2, W2)
    assert jnp.allclose(y2, y2_ref, atol=1e-4, rtol=1e-4)

    print("KERNEL_OK")
</pallas_src>

<mosaic_0001>
module attributes {stable_mosaic.version = 11 : i64} {
  func.func @_sobel_kernel_single(%arg0: i32, %arg1: memref<1x1x16x16xf32, #tpu.memory_space<vmem>>, %arg2: memref<1x1x16x16xf32, #tpu.memory_space<vmem>>) attributes {dimension_semantics = [#tpu.dimension_semantics<parallel>], iteration_bounds = array<i64: 2>, scalar_prefetch = 0 : i64, scratch_operands = 0 : i64, tpu.core_type = #tpu.core_type<tc>, window_params = [{transform_indices = @transform_0, window_bounds = array<i64: 1, 1, 16, 16>}, {transform_indices = @transform_1, window_bounds = array<i64: 1, 1, 16, 16>}]} {
    %c0 = arith.constant 0 : index
    %c0_0 = arith.constant 0 : index
    %c0_1 = arith.constant 0 : index
    %c0_2 = arith.constant 0 : index
    %0 = vector.load %arg1[%c0, %c0_0, %c0_1, %c0_2] : memref<1x1x16x16xf32, #tpu.memory_space<vmem>>, vector<1x1x16x16xf32>
    %1 = vector.shape_cast %0 : vector<1x1x16x16xf32> to vector<16x16xf32>
    %cst = arith.constant 0.000000e+00 : f32
    %2 = vector.broadcast %cst : f32 to vector<1x16xf32>
    %3 = tpu.concatenate %2, %1, %2 in 0 : vector<1x16xf32>, vector<16x16xf32>, vector<1x16xf32> -> vector<18x16xf32>
    %4 = tpu.iota {dimensions = array<i32: 1>} : vector<18x16xi32>
    %c0_i32 = arith.constant 0 : i32
    %5 = vector.broadcast %c0_i32 : i32 to vector<18x16xi32>
    %6 = arith.cmpi eq, %4, %5 : vector<18x16xi32>
    %7 = vector.extract_strided_slice %3 {offsets = [0, 15], sizes = [18, 1], strides = [1, 1]} : vector<18x16xf32> to vector<18x1xf32>
    %8 = vector.extract_strided_slice %3 {offsets = [0, 0], sizes = [18, 15], strides = [1, 1]} : vector<18x16xf32> to vector<18x15xf32>
    %9 = tpu.concatenate %7, %8 in 1 : vector<18x1xf32>, vector<18x15xf32> -> vector<18x16xf32>
    %cst_3 = arith.constant 0.000000e+00 : f32
    %10 = vector.broadcast %cst_3 : f32 to vector<18x16xf32>
    %11 = arith.select %6, %10, %9 : vector<18x16xi1>, vector<18x16xf32>
    %c15_i32 = arith.constant 15 : i32
    %12 = vector.broadcast %c15_i32 : i32 to vector<18x16xi32>
    %13 = arith.cmpi eq, %4, %12 : vector<18x16xi32>
    %14 = vector.extract_strided_slice %3 {offsets = [0, 1], sizes = [18, 15], strides = [1, 1]} : vector<18x16xf32> to vector<18x15xf32>
    %15 = vector.extract_strided_slice %3 {offsets = [0, 0], sizes = [18, 1], strides = [1, 1]} : vector<18x16xf32> to vector<18x1xf32>
    %16 = tpu.concatenate %14, %15 in 1 : vector<18x15xf32>, vector<18x1xf32> -> vector<18x16xf32>
    %cst_4 = arith.constant 0.000000e+00 : f32
    %17 = vector.broadcast %cst_4 : f32 to vector<18x16xf32>
    %18 = arith.select %13, %17, %16 : vector<18x16xi1>, vector<18x16xf32>
    %19 = arith.addf %3, %11 : vector<18x16xf32>
    %20 = arith.addf %19, %18 : vector<18x16xf32>
    %21 = vector.extract_strided_slice %20 {offsets = [0, 0], sizes = [16, 16], strides = [1, 1]} : vector<18x16xf32> to vector<16x16xf32>
    %22 = vector.extract_strided_slice %20 {offsets = [1, 0], sizes = [16, 16], strides = [1, 1]} : vector<18x16xf32> to vector<16x16xf32>
    %23 = arith.addf %21, %22 : vector<16x16xf32>
    %24 = vector.extract_strided_slice %20 {offsets = [2, 0], sizes = [16, 16], strides = [1, 1]} : vector<18x16xf32> to vector<16x16xf32>
    %25 = arith.addf %23, %24 : vector<16x16xf32>
    %cst_5 = arith.constant 9.000000e+00 : f32
    %26 = vector.broadcast %cst_5 : f32 to vector<16x16xf32>
    %27 = arith.mulf %26, %1 : vector<16x16xf32>
    %28 = arith.subf %27, %25 : vector<16x16xf32>
    %c0_6 = arith.constant 0 : index
    %c0_7 = arith.constant 0 : index
    %c0_8 = arith.constant 0 : index
    %c0_9 = arith.constant 0 : index
    %29 = vector.load %arg2[%c0_6, %c0_7, %c0_8, %c0_9] : memref<1x1x16x16xf32, #tpu.memory_space<vmem>>, vector<1x1x16x16xf32>
    %30 = vector.shape_cast %29 : vector<1x1x16x16xf32> to vector<16x16xf32>
    %31 = vector.shape_cast %28 : vector<16x16xf32> to vector<1x1x16x16xf32>
    tpu.vector_store %arg2[%c0_6, %c0_7, %c0_8, %c0_9], %31 {strides = array<i32>} : memref<1x1x16x16xf32, #tpu.memory_space<vmem>>, vector<1x1x16x16xf32>,
    return
  }
  func.func @transform_0(%arg0: i32) -> (i32, i32, i32, i32) {
    %c1_i32 = arith.constant 1 : i32
    %c0_i32 = arith.constant 0 : i32
    %c0_i32_0 = arith.constant 0 : i32
    %c0_i32_1 = arith.constant 0 : i32
    return %arg0, %c1_i32, %c0_i32, %c0_i32_0 : i32, i32, i32, i32
  }
  func.func @transform_1(%arg0: i32) -> (i32, i32, i32, i32) {
    %c0_i32 = arith.constant 0 : i32
    %c0_i32_0 = arith.constant 0 : i32
    %c0_i32_1 = arith.constant 0 : i32
    %c0_i32_2 = arith.constant 0 : i32
    return %arg0, %c0_i32, %c0_i32_0, %c0_i32_1 : i32, i32, i32, i32
  }
}

</mosaic_0001>

<llo_original>
// kernel: tpu_custom_call.1
$region0: #{tpu_custom_call.1}
  #allocation0 [shape = 'u32[]', space=smem, size = 0x4, offset = 0x4, fixed_abs, tag = 'smem constant byte address 0x4 - core index']
  #allocation1 [shape = 'u32[72,128]{1,0:T(1,128)}', space=vmem, size = 0x9000, scoped, tag = 'internal scratch']
  %s0 = inlined_call_operand.hbm [shape: f32[2,4,16,16], index: 0, kind: input, shape index: {}]
  %s1 = inlined_call_operand.hbm [shape: f32[2,1,16,16], index: 1, kind: output, shape index: {}]
  %s2 = sld [smem:[#allocation0]]
  $region41: #{tpu_custom_call.1} parent=0
    _
  %s4 = ssub.s32 1, %s2
  %s5 = scalar_select 0, %s4, %s2
  $region1: #{tpu_custom_call.1} parent=0
    #allocation2 [shape = 'u8[16384]{0}', space=vmem, size = 0x4000, scoped, tag = 'input window, operand 0']
    #allocation3 [shape = 's32[2]{0}', space=sflag, size = 0x8, scoped, tag = 'scoped memory for tpu_custom_call.1']
    #allocation4 [shape = 's32[2]{0}', space=sflag, size = 0x8, scoped, tag = 'scoped memory for tpu_custom_call.1']
    #allocation5 [shape = 'u8[16384]{0}', space=vmem, size = 0x4000, scoped, tag = 'output window, operand 0']
    %6 = vsyncpa [#allocation3], 0
    %s7 = scalar_lea.sflag [#allocation3], 1
    %8 = vsyncpa %s7, 0
    %9 = vsyncpa [#allocation4], 0
    %s10 = scalar_lea.sflag [#allocation4], 1
    %11 = vsyncpa %s10, 0
    loop: start=0, step=1, limit=4
    $region2: #{tpu_custom_call.1} parent=1 // loop_pre_header
      _
    $region3: #{tpu_custom_call.1} parent=1 // loop_header
      %s13 = sphi 0, %s17
      %p14 = scmp.ge.s32.totalorder %s13, 4
      %s23 = sphi 0, %s25
      %s26 = sphi 0, %s23
      %s27 = sphi 0, %s26
      %s43 = sphi 0, %s27
      %s49 = sphi 0, %s51
      %s52 = sphi 0, %s49
      %s53 = sphi 0, %s52
      %s69 = sphi 0, %s53
    $region4: #{tpu_custom_call.1} parent=1 // loop_header_branch
      %16 = sbr.rel (%p14) target = $region8
    $region5: #{tpu_custom_call.1} parent=1 // loop_body
      %s18 = ssub.s32 %s13, 1
      %s19 = ssub.s32 %s13, 2
      %s20 = sadd.s32 %s13, 1
      %s21 = ssub.s32 %s13, %s20
      %p22 = scmp.eq.s32.totalorder %s21, 0
      %s24 = sadd.s32 %s23, 1
      %s25 = scalar_select %p22, %s23, %s24
      %p28 = pneg %p22
      %p29 = scmp.eq.s32.totalorder %s13, 1
      %p30 = por %p28, %p29
      %p31 = scmp.ne.s32.totalorder %s23, %s26
      %p32 = scmp.eq.s32.totalorder %s13, 0
      %p33 = por %p31, %p32
      %p34 = scmp.ne.s32.totalorder %s23, %s26
      %p35 = scmp.eq.s32.totalorder %s18, 1
      %p36 = por %p34, %p35
      %p37 = scmp.ne.s32.totalorder %s26, %s27
      %p38 = scmp.eq.s32.totalorder %s18, 0
      %p39 = por %p37, %p38
      %p40 = scmp.ne.s32.totalorder %s26, %s27
      %p41 = scmp.eq.s32.totalorder %s19, 1
      %p42 = por %p40, %p41
      %p44 = scmp.ne.s32.totalorder %s27, %s43
      %p45 = scmp.eq.s32.totalorder %s19, 0
      %p46 = por %p44, %p45
      %s47 = ssub.s32 %s13, %s20
      %p48 = scmp.eq.s32.totalorder %s47, 0
      %s50 = sadd.s32 %s49, 1
      %s51 = scalar_select %p48, %s49, %s50
      %p54 = pneg %p48
      %p55 = scmp.eq.s32.totalorder %s13, 1
      %p56 = por %p54, %p55
      %p57 = scmp.ne.s32.totalorder %s49, %s52
      %p58 = scmp.eq.s32.totalorder %s13, 0
      %p59 = por %p57, %p58
      %p60 = scmp.ne.s32.totalorder %s49, %s52
      %p61 = scmp.eq.s32.totalorder %s18, 1
      %p62 = por %p60, %p61
      %p63 = scmp.ne.s32.totalorder %s52, %s53
      %p64 = scmp.eq.s32.totalorder %s18, 0
      %p65 = por %p63, %p64
      %p66 = scmp.ne.s32.totalorder %s52, %s53
      %p67 = scmp.eq.s32.totalorder %s19, 1
      %p68 = por %p66, %p67
      %p70 = scmp.ne.s32.totalorder %s53, %s69
      %p71 = scmp.eq.s32.totalorder %s19, 0
      %p72 = por %p70, %p71
      %p73 = scmp.le.s32.totalorder 1, %s13
      %p74 = scmp.lt.s32.totalorder %s13, 3
      %p75 = pnand %p73, %p74
      %p76 = pneg %p75
      // Predicated region
      $region9: #{tpu_custom_call.1} parent=5 // pred_check
        _
      $region10: #{tpu_custom_call.1} parent=5 // pred_check_branch
        %78 = sbr.rel (%p75) target = $region12
      $region11: #{tpu_custom_call.1} parent=5 // pred_region
        %s79 = ssub.s32 %s13, 1
      $region12: #{tpu_custom_call.1} parent=5 // pred_fallthru
        _
      %p80 = scmp.lt.s32.totalorder %s13, 2
      // Predicated region
      $region13: #{tpu_custom_call.1} parent=5 // pred_check
        %p81 = pneg %p80
      $region14: #{tpu_custom_call.1} parent=5 // pred_check_branch
        %83 = sbr.rel (%p81) target = $region16
      $region15: #{tpu_custom_call.1} parent=5 // pred_region
        // Predicated region
        $region17: #{tpu_custom_call.1} parent=15 // pred_check
          %p84 = pneg %p33
        $region18: #{tpu_custom_call.1} parent=15 // pred_check_branch
          %86 = sbr.rel (%p84) target = $region20
        $region19: #{tpu_custom_call.1} parent=15 // pred_region
          %s87 = sand.u32 %s23, 1
          %s88 = scalar_lea.sflag [#allocation3], %s87
          %s89 = sand.u32 %s23, 1
          %s90 = smul.addr %s89, 16
          %s91 = scalar_lea.vmem [#allocation2], %s90
          %93 = vsyncadd %s88, 0
          %s94 = smul.addr %s13, 8
          %s95 = sadd.s32 2, %s94
          %s96 = smul.addr %s95, 8
          %s97 = scalar_lea.hbm %s0, %s96
          %s98 = sshll.u32 %s97, 4
          %s99 = int_to_ptr.hbm [resolvable:$true] %s98
          %s100 = sshll.u32 %s91, 4
          %s101 = int_to_ptr.vmem [resolvable:$true] %s100
          %106 = dma.hbm_to_vmem [thread:$0]  %s99, 256, %s101, %s88, 128, 128, 8
        $region20: #{tpu_custom_call.1} parent=15 // pred_fallthru
          _
      $region16: #{tpu_custom_call.1} parent=5 // pred_fallthru
        _
      %p107 = scmp.le.s32.totalorder 1, %s13
      %p108 = scmp.lt.s32.totalorder %s13, 3
      %p109 = pnand %p107, %p108
      %p110 = pneg %p109
      // Predicated region
      $region21: #{tpu_custom_call.1} parent=5 // pred_check
        _
      $region22: #{tpu_custom_call.1} parent=5 // pred_check_branch
        %112 = sbr.rel (%p109) target = $region24
      $region23: #{tpu_custom_call.1} parent=5 // pred_region
        %s113 = ssub.s32 %s13, 1
        %s114 = sand.u32 %s26, 1
        %s115 = scalar_lea.sflag [#allocation3], %s114
        %s116 = sand.u32 %s26, 1
        %s117 = smul.addr %s116, 16
        %s118 = scalar_lea.vmem [#allocation2], %s117
        // Predicated region
        $region25: #{tpu_custom_call.1} parent=23 // pred_check
          %p119 = pneg %p39
        $region26: #{tpu_custom_call.1} parent=23 // pred_check_branch
          %121 = sbr.rel (%p119) target = $region28
        $region27: #{tpu_custom_call.1} parent=23 // pred_region
          %123 = dma.done %s115, 256
        $region28: #{tpu_custom_call.1} parent=23 // pred_fallthru
          _
        %s124 = sand.u32 %s26, 1
        %s125 = scalar_lea.sflag [#allocation3], %s124
        %s126 = sand.u32 %s26, 1
        %s127 = smul.addr %s126, 16
        %s128 = scalar_lea.vmem [#allocation2], %s127
        %p129 = pneg %p39
        %p130 = pneg %p36
        %p131 = pneg %p65
        %p132 = pneg %p62
        %s133 = sand.u32 %s52, 1
        %s134 = scalar_lea.sflag [#allocation4], %s133
        %s135 = sand.u32 %s52, 1
        %s136 = smul.addr %s135, 16
        %s137 = scalar_lea.vmem [#allocation5], %s136
        %v138 = vld [vmem:[%s118] sm:$0xff]
        %v139 = vld [vmem:[%s118 + $0x8] sm:$0xff]
        %vm142 = vcmask 1040384
        %v143 = vrot.slane %v138, 7
        %v144 = vrot.slane %v139, 7
        %v145 = vsel %vm142, %v143, %v144
        %v149 = vsel %vm142, 0.0, %v143
        %v150 = vsel %vm142, %v144, 0.0
        %v151 = vlaneseq
        %v152 = vand.u32 %v151, 127
        %vm153 = vcmp.eq.s32.totalorder %v152, 0
        %156 = vrot.lane.b32.xlu0 %v149, 113
        %v157 = vpop.permute.xlu0 %156
        %158 = vrot.lane.b32.xlu0 %v145, 113
        %v159 = vpop.permute.xlu0 %158
        %160 = vrot.lane.b32.xlu0 %v150, 113
        %v161 = vpop.permute.xlu0 %160
        %165 = vrot.lane.b32.xlu0 %v149, 1
        %v166 = vpop.permute.xlu0 %165
        %167 = vrot.lane.b32.xlu0 %v145, 1
        %v168 = vpop.permute.xlu0 %167
        %169 = vrot.lane.b32.xlu0 %v150, 1
        %v170 = vpop.permute.xlu0 %169
        %vm174 = vcmask 7168
        %v175 = vsel %vm174, %v157, %v166
        %v176 = vsel %vm174, %v159, %v168
        %v177 = vsel %vm174, %v161, %v170
        %v178 = vsel %vm153, 0.0, %v175
        %v179 = vsel %vm153, 0.0, %v176
        %v180 = vsel %vm153, 0.0, %v177
        %vm181 = vcmp.eq.s32.totalorder %v152, 15
        %182 = vrot.lane.b32.xlu0 %v149, 127
        %v183 = vpop.permute.xlu0 %182
        %184 = vrot.lane.b32.xlu0 %v145, 127
        %v185 = vpop.permute.xlu0 %184
        %186 = vrot.lane.b32.xlu0 %v150, 127
        %v187 = vpop.permute.xlu0 %186
        %191 = vrot.lane.b32.xlu0 %v149, 15
        %v192 = vpop.permute.xlu0 %191
        %193 = vrot.lane.b32.xlu0 %v145, 15
        %v194 = vpop.permute.xlu0 %193
        %195 = vrot.lane.b32.xlu0 %v150, 15
        %v196 = vpop.permute.xlu0 %195
        %vm200 = vcmask 121856
        %v201 = vsel %vm200, %v183, %v192
        %v202 = vsel %vm200, %v185, %v194
        %v203 = vsel %vm200, %v187, %v196
        %v204 = vsel %vm181, 0.0, %v201
        %v205 = vsel %vm181, 0.0, %v202
        %v206 = vsel %vm181, 0.0, %v203
        %v207 = vadd.f32 %v149, %v178
        %v208 = vadd.f32 %v145, %v179
        %v209 = vadd.f32 %v150, %v180
        %v210 = vadd.f32 %v207, %v204
        %v211 = vadd.f32 %v208, %v205
        %v212 = vadd.f32 %v209, %v206
        %vm216 = vcmask 1046528
        %v217 = vrot.slane %v210, 1
        %v218 = vrot.slane %v211, 1
        %v219 = vsel %vm216, %v217, %v218
        %v220 = vrot.slane %v212, 1
        %v221 = vsel %vm216, %v218, %v220
        %v224 = vadd.f32 %v210, %v219
        %v225 = vadd.f32 %v211, %v221
        %vm226 = vcmask 1045504
        %v227 = vrot.slane %v210, 2
        %v228 = vrot.slane %v211, 2
        %v229 = vsel %vm226, %v227, %v228
        %v230 = vrot.slane %v212, 2
        %v231 = vsel %vm226, %v228, %v230
        %v234 = vadd.f32 %v224, %v229
        %v235 = vadd.f32 %v225, %v231
        %v236 = vmul.f32 %v138, 9.0
        %v237 = vmul.f32 %v139, 9.0
        %v238 = vsub.f32 %v236, %v234
        %v239 = vsub.f32 %v237, %v235
        %vm240 = vcmask 130048
        %241 = vst.msk [vmem:[%s137] sm:$0xff] %vm240, %v238
        %242 = vst.msk [vmem:[%s137 + $0x8] sm:$0xff] %vm240, %v239
        %s243 = sand.u32 %s52, 1
        %s244 = scalar_lea.sflag [#allocation4], %s243
        %s245 = sand.u32 %s52, 1
        %s246 = smul.addr %s245, 16
        %s247 = scalar_lea.vmem [#allocation5], %s246
        // Predicated region
        $region29: #{tpu_custom_call.1} parent=23 // pred_check
          %p248 = pneg %p62
        $region30: #{tpu_custom_call.1} parent=23 // pred_check_branch
          %250 = sbr.rel (%p248) target = $region32
        $region31: #{tpu_custom_call.1} parent=23 // pred_region
          %252 = vsyncadd %s244, 0
          %s253 = smul.addr %s18, 2
          %s254 = smul.addr %s253, 8
          %s255 = scalar_lea.hbm %s1, %s254
          %s256 = sshll.u32 %s247, 4
          %s257 = int_to_ptr.vmem [resolvable:$true] %s256
          %s258 = sshll.u32 %s255, 4
          %s259 = int_to_ptr.hbm [resolvable:$true] %s258
          %264 = dma.vmem_to_hbm [thread:$0]  %s257, 256, %s259, %s244, 128, 128, 8
        $region32: #{tpu_custom_call.1} parent=23 // pred_fallthru
          _
      $region24: #{tpu_custom_call.1} parent=5 // pred_fallthru
        _
      %p265 = scmp.le.s32.totalorder 2, %s13
      // Predicated region
      $region33: #{tpu_custom_call.1} parent=5 // pred_check
        %p266 = pneg %p265
      $region34: #{tpu_custom_call.1} parent=5 // pred_check_branch
        %268 = sbr.rel (%p266) target = $region36
      $region35: #{tpu_custom_call.1} parent=5 // pred_region
        %s269 = ssub.s32 %s13, 2
        // Predicated region
        $region37: #{tpu_custom_call.1} parent=35 // pred_check
          %p270 = pneg %p68
        $region38: #{tpu_custom_call.1} parent=35 // pred_check_branch
          %272 = sbr.rel (%p270) target = $region40
        $region39: #{tpu_custom_call.1} parent=35 // pred_region
          %s273 = sand.u32 %s53, 1
          %s274 = scalar_lea.sflag [#allocation4], %s273
          %s275 = sand.u32 %s53, 1
          %s276 = smul.addr %s275, 16
          %s277 = scalar_lea.vmem [#allocation5], %s276
          %279 = dma.done %s274, 256
        $region40: #{tpu_custom_call.1} parent=35 // pred_fallthru
          _
      $region36: #{tpu_custom_call.1} parent=5 // pred_fallthru
        _
    $region6: #{tpu_custom_call.1} parent=1 // loop_footer
      %s17 = sadd.s32 1, %s13
    $region7: #{tpu_custom_call.1} parent=1 // loop_footer_branch
      %12 = sbr.rel target = $region3
    $region8: #{tpu_custom_call.1} parent=1 // loop_exit
      _
    %280 = vsyncpa [#allocation3], 1
    %s281 = scalar_lea.sflag [#allocation3], 1
    %282 = vsyncpa %s281, 1
    %283 = vsyncpa [#allocation4], 1
    %s284 = scalar_lea.sflag [#allocation4], 1
    %285 = vsyncpa %s284, 1

</llo_original>
